<compile_context>
chip_gen: v7x
topology: tpu7x:2x2x1
jax: 0.10.0
libtpu: 0.0.40
codegen_flags: <defaults>
</compile_context>

<pallas_src>
import math
import functools

import jax
import jax.numpy as jnp
from jax.experimental import pallas as pl
from jax.experimental.pallas import tpu as pltpu

# --- module hyper-parameters (Embeddings.__init__) ---
V = 64          # word_vocab_size
D = 32          # word_vec_size == embedding_size (even, required by PositionalEncoding)
PAD_IDX = 1     # word_padding_idx -> that embedding row is zero
MAX_LEN = 5000  # PositionalEncoding max_len
PACK = 4        # tokens packed per 128-lane output row (PACK * D == 128)


def _sinusoid_pe(max_len, dim):
    """Same construction as PositionalEncoding.__init__ (pe buffer, squeezed)."""
    position = jnp.arange(max_len, dtype=jnp.float32)[:, None]
    div_term = jnp.exp(
        jnp.arange(0, dim, 2, dtype=jnp.float32) * -(math.log(10000.0) / dim)
    )
    pe = jnp.zeros((max_len, dim), jnp.float32)
    pe = pe.at[:, 0::2].set(jnp.sin(position * div_term))
    pe = pe.at[:, 1::2].set(jnp.cos(position * div_term))
    return pe


def pack_embedding_params(table, pe):
    """One-time parameter packing (at init, not per forward call).

    * folds the sqrt(D) PositionalEncoding scale into the word table,
    * lays the table out block-diagonally (4*V, 4*D) so one one-hot matmul emits
      PACK tokens per lane-dense 128-wide output row,
    * retiles the sinusoidal PE buffer to the same (rows, PACK*D) packed layout.
    """
    ts = table.astype(jnp.float32) * jnp.float32(math.sqrt(D))
    table4 = jnp.zeros((PACK * V, PACK * D), jnp.float32)
    for g in range(PACK):
        table4 = table4.at[g * V:(g + 1) * V, g * D:(g + 1) * D].set(ts)
    pe_packed = pe.reshape(pe.shape[0] // PACK, PACK * D)   # (MAX_LEN/4, 128)
    return table4, pe_packed


def _choose_seq_tile(seq_len, max_tokens=4096):
    """Largest divisor of seq_len that is <= max_tokens tokens and keeps the packed
    sublane dim (tile // PACK) a multiple of 8 (TPU (8,128) block constraint)."""
    step = PACK * 8
    best = None
    for cand in range(step, min(seq_len, max_tokens) + 1, step):
        if seq_len % cand == 0:
            best = cand
    if best is None:
        raise ValueError(
            f"seq_len={seq_len} needs a divisor that is a multiple of {step}; "
            "pad the sequence upstream.")
    return best


def _embeddings_kernel(idx_ref, tab_ref, pe_ref, out_ref, *, vocab, pack):
    """One token tile: gather PACK tokens/row via a one-hot @ block-diag table
    (MXU), then add the packed positional encoding.  Dropout p=0 -> identity.

    idx_ref: (TP, pack)          int32   VMEM  (TP = token_tile // pack)
    tab_ref: (pack*V, pack*D)    float32 VMEM  (block-diag, sqrt(D) pre-folded)
    pe_ref:  (TP, pack*D)        float32 VMEM
    out_ref: (TP, pack*D)        float32 VMEM  (lane-dense, 128 lanes)
    """
    idx = idx_ref[...]                                               # (TP, pack)
    tp = idx.shape[0]
    # One full-width column iota (TP, pack*V); group g occupies columns
    # [g*V, (g+1)*V).  Accumulate per-group compares (VPU only, no lane concat).
    viota = jax.lax.broadcasted_iota(jnp.int32, (tp, pack * vocab), 1)
    onehot = jnp.zeros((tp, pack * vocab), jnp.float32)
    for g in range(pack):
        # idx values are in [0, vocab), so groups never collide -> exact one-hot.
        onehot = onehot + (viota == (idx[:, g:g + 1] + g * vocab)).astype(jnp.float32)
    emb = jnp.dot(onehot, tab_ref[...],
                  preferred_element_type=jnp.float32)                # (TP, pack*D)
    out_ref[...] = emb + pe_ref[...]


def embeddings_forward(source, table4, pe_packed):
    """Equivalent of Embeddings.forward(source) for the default (word-only) config.

    source:    (B, L, 1) int32 word indices (batch-first).
    table4:    packed word table from pack_embedding_params.
    pe_packed: packed PE buffer from pack_embedding_params.
    returns:   (B, L, D) float32 embeddings.
    """
    B, L, _nfeat = source.shape
    if L % (PACK * 8) != 0:
        # TODO(synk): pad ragged seq_len to a multiple of 32 upstream if needed.
        raise ValueError(f"seq_len={L} must be a multiple of {PACK * 8}")
    T = B * L
    tile = _choose_seq_tile(L)          # token tile, divides L
    tp = tile // PACK                   # packed rows per grid step
    n_seq_blocks = L // tile
    grid = (T // tile,)

    idx4 = source[..., 0].reshape(T // PACK, PACK).astype(jnp.int32)  # contiguous
    pe_blk = pe_packed[: L // PACK]                                    # (L/4, 128)

    pe_map = (lambda i: (i % n_seq_blocks, 0)) if n_seq_blocks > 1 else (lambda i: (0, 0))

    out = pl.pallas_call(
        functools.partial(_embeddings_kernel, vocab=V, pack=PACK),
        out_shape=jax.ShapeDtypeStruct((T // PACK, PACK * D), jnp.float32),
        grid=grid,
        in_specs=[
            pl.BlockSpec((tp, PACK), lambda i: (i, 0)),               # indices
            pl.BlockSpec((PACK * V, PACK * D), lambda i: (0, 0)),     # table (resident)
            pl.BlockSpec((tp, PACK * D), pe_map),                     # PE (resident/mod)
        ],
        out_specs=pl.BlockSpec((tp, PACK * D), lambda i: (i, 0)),
        compiler_params=pltpu.CompilerParams(
            dimension_semantics=("parallel",)),
    )(idx4, table4, pe_blk)

    return out.reshape(B, L, D)                                        # contiguous


if __name__ == "__main__":
    key = jax.random.PRNGKey(0)
    k_tab, k_src = jax.random.split(key)

    # Deterministic parameter init: nn.Embedding weight ~ N(0,1), padding row zeroed.
    table = jax.random.normal(k_tab, (V, D), dtype=jnp.float32)
    table = table.at[PAD_IDX].set(0.0)
    pe = _sinusoid_pe(MAX_LEN, D)

    # One-time parameter packing (sqrt(D) fold + block-diag table + PE retile).
    table4, pe_packed = pack_embedding_params(table, pe)

    # Example input: batch=2, seq_len=64, nfeat=1 (word indices only), with pads.
    B, L = 2, 64
    source = jax.random.randint(k_src, (B, L, 1), 0, V, dtype=jnp.int32)
    source = source.at[0, -1, 0].set(PAD_IDX)
    source = source.at[1, -2, 0].set(PAD_IDX)

    out = jax.jit(embeddings_forward)(source, table4, pe_packed)
    out = jax.block_until_ready(out)

    # Pure-JAX reference of the PyTorch forward semantics.
    ref = table[source[..., 0]] * jnp.float32(math.sqrt(D)) + pe[:L][None, :, :]
    assert out.shape == (B, L, D)
    assert jnp.allclose(out, ref, atol=1e-5, rtol=1e-5), "mismatch vs reference"

    print("KERNEL_OK")
</pallas_src>

<mosaic_0001>
module attributes {stable_mosaic.version = 11 : i64} {
  func.func @_embeddings_kernel(%arg0: i32, %arg1: memref<16x4xi32, #tpu.memory_space<vmem>>, %arg2: memref<256x128xf32, #tpu.memory_space<vmem>>, %arg3: memref<16x128xf32, #tpu.memory_space<vmem>>, %arg4: memref<16x128xf32, #tpu.memory_space<vmem>>) attributes {dimension_semantics = [#tpu.dimension_semantics<parallel>], iteration_bounds = array<i64: 2>, scalar_prefetch = 0 : i64, scratch_operands = 0 : i64, tpu.core_type = #tpu.core_type<tc>, window_params = [{transform_indices = @transform_0, window_bounds = array<i64: 16, 4>}, {pipeline_mode = #tpu.pipeline_mode<synchronous>, transform_indices = @transform_1, window_bounds = array<i64: 256, 128>}, {pipeline_mode = #tpu.pipeline_mode<synchronous>, transform_indices = @transform_2, window_bounds = array<i64: 16, 128>}, {transform_indices = @transform_3, window_bounds = array<i64: 16, 128>}]} {
    %c0 = arith.constant 0 : index
    %c0_0 = arith.constant 0 : index
    %0 = vector.load %arg1[%c0, %c0_0] : memref<16x4xi32, #tpu.memory_space<vmem>>, vector<16x4xi32>
    %1 = tpu.iota {dimensions = array<i32: 1>} : vector<16x256xi32>
    %cst = arith.constant 0.000000e+00 : f32
    %2 = vector.broadcast %cst : f32 to vector<16x256xf32>
    %3 = vector.extract_strided_slice %0 {offsets = [0, 0], sizes = [16, 1], strides = [1, 1]} : vector<16x4xi32> to vector<16x1xi32>
    %c0_i32 = arith.constant 0 : i32
    %4 = vector.broadcast %c0_i32 : i32 to vector<16x1xi32>
    %5 = arith.addi %3, %4 : vector<16x1xi32>
    %6 = vector.broadcast %5 : vector<16x1xi32> to vector<16x256xi32>
    %7 = arith.cmpi eq, %1, %6 : vector<16x256xi32>
    %8 = arith.extui %7 : vector<16x256xi1> to vector<16x256xi32>
    %9 = arith.sitofp %8 : vector<16x256xi32> to vector<16x256xf32>
    %10 = arith.addf %2, %9 : vector<16x256xf32>
    %11 = vector.extract_strided_slice %0 {offsets = [0, 1], sizes = [16, 1], strides = [1, 1]} : vector<16x4xi32> to vector<16x1xi32>
    %c64_i32 = arith.constant 64 : i32
    %12 = vector.broadcast %c64_i32 : i32 to vector<16x1xi32>
    %13 = arith.addi %11, %12 : vector<16x1xi32>
    %14 = vector.broadcast %13 : vector<16x1xi32> to vector<16x256xi32>
    %15 = arith.cmpi eq, %1, %14 : vector<16x256xi32>
    %16 = arith.extui %15 : vector<16x256xi1> to vector<16x256xi32>
    %17 = arith.sitofp %16 : vector<16x256xi32> to vector<16x256xf32>
    %18 = arith.addf %10, %17 : vector<16x256xf32>
    %19 = vector.extract_strided_slice %0 {offsets = [0, 2], sizes = [16, 1], strides = [1, 1]} : vector<16x4xi32> to vector<16x1xi32>
    %c128_i32 = arith.constant 128 : i32
    %20 = vector.broadcast %c128_i32 : i32 to vector<16x1xi32>
    %21 = arith.addi %19, %20 : vector<16x1xi32>
    %22 = vector.broadcast %21 : vector<16x1xi32> to vector<16x256xi32>
    %23 = arith.cmpi eq, %1, %22 : vector<16x256xi32>
    %24 = arith.extui %23 : vector<16x256xi1> to vector<16x256xi32>
    %25 = arith.sitofp %24 : vector<16x256xi32> to vector<16x256xf32>
    %26 = arith.addf %18, %25 : vector<16x256xf32>
    %27 = vector.extract_strided_slice %0 {offsets = [0, 3], sizes = [16, 1], strides = [1, 1]} : vector<16x4xi32> to vector<16x1xi32>
    %c192_i32 = arith.constant 192 : i32
    %28 = vector.broadcast %c192_i32 : i32 to vector<16x1xi32>
    %29 = arith.addi %27, %28 : vector<16x1xi32>
    %30 = vector.broadcast %29 : vector<16x1xi32> to vector<16x256xi32>
    %31 = arith.cmpi eq, %1, %30 : vector<16x256xi32>
    %32 = arith.extui %31 : vector<16x256xi1> to vector<16x256xi32>
    %33 = arith.sitofp %32 : vector<16x256xi32> to vector<16x256xf32>
    %34 = arith.addf %26, %33 : vector<16x256xf32>
    %c0_1 = arith.constant 0 : index
    %c0_2 = arith.constant 0 : index
    %35 = vector.load %arg2[%c0_1, %c0_2] : memref<256x128xf32, #tpu.memory_space<vmem>>, vector<256x128xf32>
    %cst_3 = arith.constant dense<0.000000e+00> : vector<16x128xf32>
    %36 = tpu.matmul %34, %35, %cst_3 {dimension_numbers = #tpu.dot_dimension_numbers<[1], [0], [0], [1], [0, 0, 1, 1], [], []>} : vector<16x256xf32>, vector<256x128xf32>, vector<16x128xf32> -> vector<16x128xf32>
    %c0_4 = arith.constant 0 : index
    %c0_5 = arith.constant 0 : index
    %37 = vector.load %arg3[%c0_4, %c0_5] : memref<16x128xf32, #tpu.memory_space<vmem>>, vector<16x128xf32>
    %38 = arith.addf %36, %37 : vector<16x128xf32>
    %c0_6 = arith.constant 0 : index
    %c0_7 = arith.constant 0 : index
    %39 = vector.load %arg4[%c0_6, %c0_7] : memref<16x128xf32, #tpu.memory_space<vmem>>, vector<16x128xf32>
    tpu.vector_store %arg4[%c0_6, %c0_7], %38 {strides = array<i32>} : memref<16x128xf32, #tpu.memory_space<vmem>>, vector<16x128xf32>,
    return
  }
  func.func @transform_0(%arg0: i32) -> (i32, i32) {
    %c0_i32 = arith.constant 0 : i32
    %c0_i32_0 = arith.constant 0 : i32
    return %arg0, %c0_i32 : i32, i32
  }
  func.func @transform_1(%arg0: i32) -> (i32, i32) {
    %c0_i32 = arith.constant 0 : i32
    %c0_i32_0 = arith.constant 0 : i32
    %c0_i32_1 = arith.constant 0 : i32
    return %c0_i32, %c0_i32_0 : i32, i32
  }
  func.func @transform_2(%arg0: i32) -> (i32, i32) {
    %c0_i32 = arith.constant 0 : i32
    %c0_i32_0 = arith.constant 0 : i32
    %c0_i32_1 = arith.constant 0 : i32
    return %c0_i32, %c0_i32_0 : i32, i32
  }
  func.func @transform_3(%arg0: i32) -> (i32, i32) {
    %c0_i32 = arith.constant 0 : i32
    %c0_i32_0 = arith.constant 0 : i32
    return %arg0, %c0_i32 : i32, i32
  }
}

</mosaic_0001>

<llo_original>
// kernel: squeeze.1
$region0: #{squeeze.1}
  %s0 = inlined_call_operand.vmem [shape: s32[2,64], index: 0, kind: input, shape index: {}]
  %s1 = inlined_call_operand.vmem [shape: s32[32,4], index: 1, kind: output, shape index: {}]
  $region1: #{squeeze.1} parent=0
    #allocation0 [shape = 'u8[4096]{0}', space=vmem, size = 0x1000, scoped, tag = 'scoped mem for input reshape']
    %s3 = sshllo.u32 0, 2
    %v4 = vld [vmem:[%s0] sm:%s3]
    %5 = vst [vmem:[#allocation0] sm:%s3] %v4
    %v6 = vld [vmem:[#allocation0] sm:$0x3]
    %vm7 = vcmask 31744
    %8 = vst.msk [vmem:[%s1] ss:$16 sm:$0x3] %vm7, %v6
    %v9 = vld [vmem:[#allocation0] sm:$0x3]
    %10 = vrot.lane.b32.xlu0 %v9, 124
    %v11 = vpop.permute.xlu0 %10
    %vm12 = vcmask 31744
    %s13 = scalar_lea.vmem %s1, 1
    %14 = vst.msk [vmem:[%s13] ss:$16 sm:$0x3] %vm12, %v11
    %v15 = vld [vmem:[#allocation0] sm:$0x3]
    %16 = vrot.lane.b32.xlu0 %v15, 120
    %v17 = vpop.permute.xlu0 %16
    %vm18 = vcmask 31744
    %s19 = scalar_lea.vmem %s1, 2
    %20 = vst.msk [vmem:[%s19] ss:$16 sm:$0x3] %vm18, %v17
    %v21 = vld [vmem:[#allocation0] sm:$0x3]
    %22 = vrot.lane.b32.xlu0 %v21, 116
    %v23 = vpop.permute.xlu0 %22
    %vm24 = vcmask 31744
    %s25 = scalar_lea.vmem %s1, 3
    %26 = vst.msk [vmem:[%s25] ss:$16 sm:$0x3] %vm24, %v23
    %v27 = vld [vmem:[#allocation0] sm:$0x3]
    %28 = vrot.lane.b32.xlu0 %v27, 112
    %v29 = vpop.permute.xlu0 %28
    %vm30 = vcmask 31744
    %s31 = scalar_lea.vmem %s1, 4
    %32 = vst.msk [vmem:[%s31] ss:$16 sm:$0x3] %vm30, %v29
    %v33 = vld [vmem:[#allocation0] sm:$0x3]
    %34 = vrot.lane.b32.xlu0 %v33, 108
    %v35 = vpop.permute.xlu0 %34
    %vm36 = vcmask 31744
    %s37 = scalar_lea.vmem %s1, 5
    %38 = vst.msk [vmem:[%s37] ss:$16 sm:$0x3] %vm36, %v35
    %v39 = vld [vmem:[#allocation0] sm:$0x3]
    %40 = vrot.lane.b32.xlu0 %v39, 104
    %v41 = vpop.permute.xlu0 %40
    %vm42 = vcmask 31744
    %s43 = scalar_lea.vmem %s1, 6
    %44 = vst.msk [vmem:[%s43] ss:$16 sm:$0x3] %vm42, %v41
    %v45 = vld [vmem:[#allocation0] sm:$0x3]
    %46 = vrot.lane.b32.xlu0 %v45, 100
    %v47 = vpop.permute.xlu0 %46
    %vm48 = vcmask 31744
    %s49 = scalar_lea.vmem %s1, 7
    %50 = vst.msk [vmem:[%s49] ss:$16 sm:$0x3] %vm48, %v47
    %v51 = vld [vmem:[#allocation0] sm:$0x3]
    %52 = vrot.lane.b32.xlu0 %v51, 96
    %v53 = vpop.permute.xlu0 %52
    %vm54 = vcmask 31744
    %s55 = scalar_lea.vmem %s1, 8
    %56 = vst.msk [vmem:[%s55] ss:$16 sm:$0x3] %vm54, %v53
    %v57 = vld [vmem:[#allocation0] sm:$0x3]
    %58 = vrot.lane.b32.xlu0 %v57, 92
    %v59 = vpop.permute.xlu0 %58
    %vm60 = vcmask 31744
    %s61 = scalar_lea.vmem %s1, 9
    %62 = vst.msk [vmem:[%s61] ss:$16 sm:$0x3] %vm60, %v59
    %v63 = vld [vmem:[#allocation0] sm:$0x3]
    %64 = vrot.lane.b32.xlu0 %v63, 88
    %v65 = vpop.permute.xlu0 %64
    %vm66 = vcmask 31744
    %s67 = scalar_lea.vmem %s1, 10
    %68 = vst.msk [vmem:[%s67] ss:$16 sm:$0x3] %vm66, %v65
    %v69 = vld [vmem:[#allocation0] sm:$0x3]
    %70 = vrot.lane.b32.xlu0 %v69, 84
    %v71 = vpop.permute.xlu0 %70
    %vm72 = vcmask 31744
    %s73 = scalar_lea.vmem %s1, 11
    %74 = vst.msk [vmem:[%s73] ss:$16 sm:$0x3] %vm72, %v71
    %v75 = vld [vmem:[#allocation0] sm:$0x3]
    %76 = vrot.lane.b32.xlu0 %v75, 80
    %v77 = vpop.permute.xlu0 %76
    %vm78 = vcmask 31744
    %s79 = scalar_lea.vmem %s1, 12
    %80 = vst.msk [vmem:[%s79] ss:$16 sm:$0x3] %vm78, %v77
    %v81 = vld [vmem:[#allocation0] sm:$0x3]
    %82 = vrot.lane.b32.xlu0 %v81, 76
    %v83 = vpop.permute.xlu0 %82
    %vm84 = vcmask 31744
    %s85 = scalar_lea.vmem %s1, 13
    %86 = vst.msk [vmem:[%s85] ss:$16 sm:$0x3] %vm84, %v83
    %v87 = vld [vmem:[#allocation0] sm:$0x3]
    %88 = vrot.lane.b32.xlu0 %v87, 72
    %v89 = vpop.permute.xlu0 %88
    %vm90 = vcmask 31744
    %s91 = scalar_lea.vmem %s1, 14
    %92 = vst.msk [vmem:[%s91] ss:$16 sm:$0x3] %vm90, %v89
    %v93 = vld [vmem:[#allocation0] sm:$0x3]
    %94 = vrot.lane.b32.xlu0 %v93, 68
    %v95 = vpop.permute.xlu0 %94
    %vm96 = vcmask 31744
    %s97 = scalar_lea.vmem %s1, 15
    %98 = vst.msk [vmem:[%s97] ss:$16 sm:$0x3] %vm96, %v95

// kernel: embeddings_forward.1
$region0: #{embeddings_forward.1}
  #allocation0 [shape = 'u32[]', space=smem, size = 0x4, offset = 0x4, fixed_abs, tag = 'smem constant byte address 0x4 - core index']
  #allocation1 [shape = 'u32[144,128]{1,0:T(1,128)}', space=vmem, size = 0x12000, scoped, tag = 'internal scratch']
  %s0 = inlined_call_operand.vmem [shape: s32[32,4], index: 0, kind: input, shape index: {}]
  %s1 = inlined_call_operand.hbm [shape: f32[256,128], index: 1, kind: input, shape index: {}]
  %s2 = inlined_call_operand.vmem [shape: f32[16,128], index: 2, kind: input, shape index: {}]
  %s3 = inlined_call_operand.vmem [shape: f32[32,128], index: 3, kind: output, shape index: {}]
  %s4 = sld [smem:[#allocation0]]
  $region49: #{embeddings_forward.1} parent=0
    _
  %s6 = ssub.s32 1, %s4
  %s7 = scalar_select 0, %s6, %s4
  $region1: #{embeddings_forward.1} parent=0
    #allocation2 [shape = 'u8[131072]{0}', space=vmem, size = 0x20000, scoped, tag = 'input window, operand 1, single buffered']
    #allocation3 [shape = 's32[2]{0}', space=sflag, size = 0x8, scoped, tag = 'scoped memory for embeddings_forward.1']
    %8 = vsyncpa [#allocation3], 0
    loop: start=0, step=1, limit=4
    $region2: #{embeddings_forward.1} parent=1 // loop_pre_header
      _
    $region3: #{embeddings_forward.1} parent=1 // loop_header
      %s10 = sphi 0, %s14
      %p11 = scmp.ge.s32.totalorder %s10, 4
      %s20 = sphi 0, %s22
      %s23 = sphi 0, %s20
      %s24 = sphi 0, %s23
      %s40 = sphi 0, %s24
      %s44 = sphi 0, %s44
      %s46 = sphi 0, %s44
      %s47 = sphi 0, %s46
      %s61 = sphi 0, %s47
      %s65 = sphi 0, %s65
      %s67 = sphi 0, %s65
      %s68 = sphi 0, %s67
      %s82 = sphi 0, %s68
      %s88 = sphi 0, %s90
      %s91 = sphi 0, %s88
      %s92 = sphi 0, %s91
      %s108 = sphi 0, %s92
    $region4: #{embeddings_forward.1} parent=1 // loop_header_branch
      %13 = sbr.rel (%p11) target = $region8
    $region5: #{embeddings_forward.1} parent=1 // loop_body
      %s15 = ssub.s32 %s10, 1
      %s16 = ssub.s32 %s10, 2
      %s17 = sadd.s32 %s10, 1
      %s18 = ssub.s32 %s10, %s17
      %p19 = scmp.eq.s32.totalorder %s18, 0
      %s21 = sadd.s32 %s20, 1
      %s22 = scalar_select %p19, %s20, %s21
      %p25 = pneg %p19
      %p26 = scmp.eq.s32.totalorder %s10, 1
      %p27 = por %p25, %p26
      %p28 = scmp.ne.s32.totalorder %s20, %s23
      %p29 = scmp.eq.s32.totalorder %s10, 0
      %p30 = por %p28, %p29
      %p31 = scmp.ne.s32.totalorder %s20, %s23
      %p32 = scmp.eq.s32.totalorder %s15, 1
      %p33 = por %p31, %p32
      %p34 = scmp.ne.s32.totalorder %s23, %s24
      %p35 = scmp.eq.s32.totalorder %s15, 0
      %p36 = por %p34, %p35
      %p37 = scmp.ne.s32.totalorder %s23, %s24
      %p38 = scmp.eq.s32.totalorder %s16, 1
      %p39 = por %p37, %p38
      %p41 = scmp.ne.s32.totalorder %s24, %s40
      %p42 = scmp.eq.s32.totalorder %s16, 0
      %p43 = por %p41, %p42
      %s45 = sadd.s32 %s44, 1
      %p48 = scmp.eq.s32.totalorder %s10, 1
      %p49 = scmp.ne.s32.totalorder %s44, %s46
      %p50 = scmp.eq.s32.totalorder %s10, 0
      %p51 = por %p49, %p50
      %p52 = scmp.ne.s32.totalorder %s44, %s46
      %p53 = scmp.eq.s32.totalorder %s15, 1
      %p54 = por %p52, %p53
      %p55 = scmp.ne.s32.totalorder %s46, %s47
      %p56 = scmp.eq.s32.totalorder %s15, 0
      %p57 = por %p55, %p56
      %p58 = scmp.ne.s32.totalorder %s46, %s47
      %p59 = scmp.eq.s32.totalorder %s16, 1
      %p60 = por %p58, %p59
      %p62 = scmp.ne.s32.totalorder %s47, %s61
      %p63 = scmp.eq.s32.totalorder %s16, 0
      %p64 = por %p62, %p63
      %s66 = sadd.s32 %s65, 1
      %p69 = scmp.eq.s32.totalorder %s10, 1
      %p70 = scmp.ne.s32.totalorder %s65, %s67
      %p71 = scmp.eq.s32.totalorder %s10, 0
      %p72 = por %p70, %p71
      %p73 = scmp.ne.s32.totalorder %s65, %s67
      %p74 = scmp.eq.s32.totalorder %s15, 1
      %p75 = por %p73, %p74
      %p76 = scmp.ne.s32.totalorder %s67, %s68
      %p77 = scmp.eq.s32.totalorder %s15, 0
      %p78 = por %p76, %p77
      %p79 = scmp.ne.s32.totalorder %s67, %s68
      %p80 = scmp.eq.s32.totalorder %s16, 1
      %p81 = por %p79, %p80
      %p83 = scmp.ne.s32.totalorder %s68, %s82
      %p84 = scmp.eq.s32.totalorder %s16, 0
      %p85 = por %p83, %p84
      %s86 = ssub.s32 %s10, %s17
      %p87 = scmp.eq.s32.totalorder %s86, 0
      %s89 = sadd.s32 %s88, 1
      %s90 = scalar_select %p87, %s88, %s89
      %p93 = pneg %p87
      %p94 = scmp.eq.s32.totalorder %s10, 1
      %p95 = por %p93, %p94
      %p96 = scmp.ne.s32.totalorder %s88, %s91
      %p97 = scmp.eq.s32.totalorder %s10, 0
      %p98 = por %p96, %p97
      %p99 = scmp.ne.s32.totalorder %s88, %s91
      %p100 = scmp.eq.s32.totalorder %s15, 1
      %p101 = por %p99, %p100
      %p102 = scmp.ne.s32.totalorder %s91, %s92
      %p103 = scmp.eq.s32.totalorder %s15, 0
      %p104 = por %p102, %p103
      %p105 = scmp.ne.s32.totalorder %s91, %s92
      %p106 = scmp.eq.s32.totalorder %s16, 1
      %p107 = por %p105, %p106
      %p109 = scmp.ne.s32.totalorder %s92, %s108
      %p110 = scmp.eq.s32.totalorder %s16, 0
      %p111 = por %p109, %p110
      %p112 = scmp.le.s32.totalorder 1, %s10
      %p113 = scmp.lt.s32.totalorder %s10, 3
      %p114 = pnand %p112, %p113
      %p115 = pneg %p114
      // Predicated region
      $region9: #{embeddings_forward.1} parent=5 // pred_check
        _
      $region10: #{embeddings_forward.1} parent=5 // pred_check_branch
        %117 = sbr.rel (%p114) target = $region12
      $region11: #{embeddings_forward.1} parent=5 // pred_region
        %s118 = ssub.s32 %s10, 1
        // Predicated region
        $region13: #{embeddings_forward.1} parent=11 // pred_check
          %p119 = pneg %p57
        $region14: #{embeddings_forward.1} parent=11 // pred_check_branch
          %121 = sbr.rel (%p119) target = $region16
        $region15: #{embeddings_forward.1} parent=11 // pred_region
          %s123 = ssub.s32 4096, 4096
          %124 = vsyncadd [#allocation3], %s123
          %s125 = sshll.u32 [#allocation2], 4
          %s126 = int_to_ptr.vmem [resolvable:$true] %s125
          %131 = dma.hbm_to_vmem [thread:$0]  %s1, 4096, %s126, [#allocation3], 128, 128, 8
        $region16: #{embeddings_forward.1} parent=11 // pred_fallthru
          _
        // Predicated region
        $region17: #{embeddings_forward.1} parent=11 // pred_check
          %p132 = pneg %p78
        $region18: #{embeddings_forward.1} parent=11 // pred_check_branch
          %134 = sbr.rel (%p132) target = $region20
        $region19: #{embeddings_forward.1} parent=11 // pred_region
          _
        $region20: #{embeddings_forward.1} parent=11 // pred_fallthru
          _
      $region12: #{embeddings_forward.1} parent=5 // pred_fallthru
        _
      %p135 = scmp.lt.s32.totalorder %s10, 2
      // Predicated region
      $region21: #{embeddings_forward.1} parent=5 // pred_check
        %p136 = pneg %p135
      $region22: #{embeddings_forward.1} parent=5 // pred_check_branch
        %138 = sbr.rel (%p136) target = $region24
      $region23: #{embeddings_forward.1} parent=5 // pred_region
        // Predicated region
        $region25: #{embeddings_forward.1} parent=23 // pred_check
          %p139 = pneg %p30
        $region26: #{embeddings_forward.1} parent=23 // pred_check_branch
          %141 = sbr.rel (%p139) target = $region28
        $region27: #{embeddings_forward.1} parent=23 // pred_region
          %s142 = smul.u32 2, %s10
          %p143 = scmp.lt.s32.totalorder %s142, 3
          %s144 = scalar_select %p143, %s142, 3
          %s145 = smul.addr %s144, 8
          %s146 = scalar_lea.vmem %s0, %s145
          %s147 = smul.u32 2, %s10
        $region28: #{embeddings_forward.1} parent=23 // pred_fallthru
          _
      $region24: #{embeddings_forward.1} parent=5 // pred_fallthru
        _
      %p148 = scmp.le.s32.totalorder 1, %s10
      %p149 = scmp.lt.s32.totalorder %s10, 3
      %p150 = pnand %p148, %p149
      %p151 = pneg %p150
      // Predicated region
      $region29: #{embeddings_forward.1} parent=5 // pred_check
        _
      $region30: #{embeddings_forward.1} parent=5 // pred_check_branch
        %153 = sbr.rel (%p150) target = $region32
      $region31: #{embeddings_forward.1} parent=5 // pred_region
        %s154 = ssub.s32 %s10, 1
        // Predicated region
        $region33: #{embeddings_forward.1} parent=31 // pred_check
          %p155 = pneg %p57
        $region34: #{embeddings_forward.1} parent=31 // pred_check_branch
          %157 = sbr.rel (%p155) target = $region36
        $region35: #{embeddings_forward.1} parent=31 // pred_region
          %158 = dma.done [#allocation3], 4096
        $region36: #{embeddings_forward.1} parent=31 // pred_fallthru
          _
        %s159 = smul.u32 2, %s15
        %p160 = scmp.lt.s32.totalorder %s159, 3
        %s161 = scalar_select %p160, %s159, 3
        %s162 = smul.addr %s161, 8
        %s163 = scalar_lea.vmem %s0, %s162
        %p164 = pneg %p36
        %p165 = pneg %p33
        %p166 = pneg %p57
        %p167 = pneg %p54
        %p168 = pneg %p78
        %p169 = pneg %p75
        %p170 = pneg %p104
        %p171 = pneg %p101
        %s172 = smul.u32 2, %s15
        %p173 = scmp.lt.s32.totalorder %s172, 3
        %s174 = scalar_select %p173, %s172, 3
        %s175 = smul.addr %s174, 8
        %s176 = scalar_lea.vmem %s3, %s175
        %s177 = smul.u32 2, %s15
        %p178 = scmp.lt.s32.totalorder %s177, 3
        %s179 = scalar_select %p178, %s177, 3
        %s180 = smul.addr %s179, 8
        %s181 = scalar_lea.vmem %s0, %s180
        %s182 = smul.u32 2, %s15
        %s183 = smul.u32 2, %s15
        %p184 = scmp.lt.s32.totalorder %s183, 3
        %s185 = scalar_select %p184, %s183, 3
        %s186 = smul.addr %s185, 8
        %s187 = scalar_lea.vmem %s3, %s186
        %s188 = smul.u32 2, %s15
        %v189 = vld [vmem:[%s181] sm:$0xff]
        %v190 = vld [vmem:[%s181 + $0x8] sm:$0xff]
        %v191 = vlaneseq
        %v192 = vand.u32 %v191, 127
        %v193 = vadd.s32 %v192, 128
        %194 = vset.pattern.permute.xlu0 0
        %195 = vperm.xlu0 %194, %v189
        %v196 = vpop.permute.xlu0 %195
        %197 = vset.pattern.permute.xlu0 0
        %198 = vperm.xlu0 %197, %v190
        %v199 = vpop.permute.xlu0 %198
        %vm200 = vcmp.eq.s32.totalorder %v192, %v196
        %vm201 = vcmp.eq.s32.totalorder %v193, %v196
        %vm202 = vcmp.eq.s32.totalorder %v192, %v199
        %vm203 = vcmp.eq.s32.totalorder %v193, %v199
        %v204 = vsel %vm200, 1, 0
        %v205 = vsel %vm201, 1, 0
        %v206 = vsel %vm202, 1, 0
        %v207 = vsel %vm203, 1, 0
        %v208 = vcvt.s32.f32 %v204
        %v209 = vcvt.s32.f32 %v205
        %v210 = vcvt.s32.f32 %v206
        %v211 = vcvt.s32.f32 %v207
        %v212 = vadd.f32 %v208, 0.0
        %v213 = vadd.f32 %v209, 0.0
        %v214 = vadd.f32 %v210, 0.0
        %v215 = vadd.f32 %v211, 0.0
        %v216 = vadd.s32 %v189, 64
        %v217 = vadd.s32 %v190, 64
        %218 = vset.pattern.permute.xlu0 1
        %219 = vperm.xlu0 %218, %v216
        %v220 = vpop.permute.xlu0 %219
        %221 = vset.pattern.permute.xlu0 1
        %222 = vperm.xlu0 %221, %v217
        %v223 = vpop.permute.xlu0 %222
        %vm224 = vcmp.eq.s32.totalorder %v192, %v220
        %vm225 = vcmp.eq.s32.totalorder %v193, %v220
        %vm226 = vcmp.eq.s32.totalorder %v192, %v223
        %vm227 = vcmp.eq.s32.totalorder %v193, %v223
        %v228 = vsel %vm224, 1, 0
        %v229 = vsel %vm225, 1, 0
        %v230 = vsel %vm226, 1, 0
        %v231 = vsel %vm227, 1, 0
        %v232 = vcvt.s32.f32 %v228
        %v233 = vcvt.s32.f32 %v229
        %v234 = vcvt.s32.f32 %v230
        %v235 = vcvt.s32.f32 %v231
        %v236 = vadd.f32 %v212, %v232
        %v237 = vadd.f32 %v213, %v233
        %v238 = vadd.f32 %v214, %v234
        %v239 = vadd.f32 %v215, %v235
        %v240 = vadd.s32 %v189, 128
        %v241 = vadd.s32 %v190, 128
        %242 = vset.pattern.permute.xlu0 2
        %243 = vperm.xlu0 %242, %v240
        %v244 = vpop.permute.xlu0 %243
        %245 = vset.pattern.permute.xlu0 2
        %246 = vperm.xlu0 %245, %v241
        %v247 = vpop.permute.xlu0 %246
        %vm248 = vcmp.eq.s32.totalorder %v192, %v244
        %vm249 = vcmp.eq.s32.totalorder %v193, %v244
        %vm250 = vcmp.eq.s32.totalorder %v192, %v247
        %vm251 = vcmp.eq.s32.totalorder %v193, %v247
        %v252 = vsel %vm248, 1, 0
        %v253 = vsel %vm249, 1, 0
        %v254 = vsel %vm250, 1, 0
        %v255 = vsel %vm251, 1, 0
        %v256 = vcvt.s32.f32 %v252
        %v257 = vcvt.s32.f32 %v253
        %v258 = vcvt.s32.f32 %v254
        %v259 = vcvt.s32.f32 %v255
        %v260 = vadd.f32 %v236, %v256
        %v261 = vadd.f32 %v237, %v257
        %v262 = vadd.f32 %v238, %v258
        %v263 = vadd.f32 %v239, %v259
        %v264 = vadd.s32 %v189, 192
        %v265 = vadd.s32 %v190, 192
        %266 = vset.pattern.permute.xlu0 3
        %267 = vperm.xlu0 %266, %v264
        %v268 = vpop.permute.xlu0 %267
        %269 = vset.pattern.permute.xlu0 3
        %270 = vperm.xlu0 %269, %v265
        %v271 = vpop.permute.xlu0 %270
        %vm272 = vcmp.eq.s32.totalorder %v192, %v268
        %vm273 = vcmp.eq.s32.totalorder %v193, %v268
        %vm274 = vcmp.eq.s32.totalorder %v192, %v271
        %vm275 = vcmp.eq.s32.totalorder %v193, %v271
        %v276 = vsel %vm272, 1, 0
        %v277 = vsel %vm273, 1, 0
        %v278 = vsel %vm274, 1, 0
        %v279 = vsel %vm275, 1, 0
        %v280 = vcvt.s32.f32 %v276
        %v281 = vcvt.s32.f32 %v277
        %v282 = vcvt.s32.f32 %v278
        %v283 = vcvt.s32.f32 %v279
        %v284 = vadd.f32 %v260, %v280
        %v285 = vadd.f32 %v261, %v281
        %v286 = vadd.f32 %v262, %v282
        %v287 = vadd.f32 %v263, %v283
        %v288 = vld [vmem:[#allocation2] sm:$0xff]
        %v289 = vld [vmem:[#allocation2 + $0x8] sm:$0xff]
        %v290 = vld [vmem:[#allocation2 + $0x10] sm:$0xff]
        %v291 = vld [vmem:[#allocation2 + $0x18] sm:$0xff]
        %v292 = vld [vmem:[#allocation2 + $0x20] sm:$0xff]
        %v293 = vld [vmem:[#allocation2 + $0x28] sm:$0xff]
        %v294 = vld [vmem:[#allocation2 + $0x30] sm:$0xff]
        %v295 = vld [vmem:[#allocation2 + $0x38] sm:$0xff]
        %v296 = vld [vmem:[#allocation2 + $0x40] sm:$0xff]
        %v297 = vld [vmem:[#allocation2 + $0x48] sm:$0xff]
        %v298 = vld [vmem:[#allocation2 + $0x50] sm:$0xff]
        %v299 = vld [vmem:[#allocation2 + $0x58] sm:$0xff]
        %v300 = vld [vmem:[#allocation2 + $0x60] sm:$0xff]
        %v301 = vld [vmem:[#allocation2 + $0x68] sm:$0xff]
        %v302 = vld [vmem:[#allocation2 + $0x70] sm:$0xff]
        %v303 = vld [vmem:[#allocation2 + $0x78] sm:$0xff]
        %v304 = vld [vmem:[#allocation2 + $0x80] sm:$0xff]
        %v305 = vld [vmem:[#allocation2 + $0x88] sm:$0xff]
        %v306 = vld [vmem:[#allocation2 + $0x90] sm:$0xff]
        %v307 = vld [vmem:[#allocation2 + $0x98] sm:$0xff]
        %v308 = vld [vmem:[#allocation2 + $0xa0] sm:$0xff]
        %v309 = vld [vmem:[#allocation2 + $0xa8] sm:$0xff]
        %v310 = vld [vmem:[#allocation2 + $0xb0] sm:$0xff]
        %v311 = vld [vmem:[#allocation2 + $0xb8] sm:$0xff]
        %v312 = vld [vmem:[#allocation2 + $0xc0] sm:$0xff]
        %v313 = vld [vmem:[#allocation2 + $0xc8] sm:$0xff]
        %v314 = vld [vmem:[#allocation2 + $0xd0] sm:$0xff]
        %v315 = vld [vmem:[#allocation2 + $0xd8] sm:$0xff]
        %v316 = vld [vmem:[#allocation2 + $0xe0] sm:$0xff]
        %v317 = vld [vmem:[#allocation2 + $0xe8] sm:$0xff]
        %v318 = vld [vmem:[#allocation2 + $0xf0] sm:$0xff]
        %v319 = vld [vmem:[#allocation2 + $0xf8] sm:$0xff]
        %v320 = vld [vmem:[%s2] sm:$0xff]
        %v321 = vld [vmem:[%s2 + $0x8] sm:$0xff]
        %322 = vmatprep.subr.mxu0 0.0
        %323 = vmatpush1.msra.mxu0 %v288
        %324 = vmatprep.subr.mxu0 0.0
        %325 = vmatpush1.msra.mxu0 %v289
        %326 = vmatprep.subr.mxu0 0.0
        %327 = vmatpush1.msra.mxu0 %v290
        %328 = vmatprep.subr.mxu0 0.0
        %329 = vmatpush1.msra.mxu0 %v291
        %330 = vmatprep.subr.mxu0 0.0
        %331 = vmatpush1.msra.mxu0 %v292
        %332 = vmatprep.subr.mxu0 0.0
        %333 = vmatpush1.msra.mxu0 %v293
        %334 = vmatprep.subr.mxu0 0.0
        %335 = vmatpush1.msra.mxu0 %v294
        %336 = vmatprep.subr.mxu0 0.0
        %337 = vmatpush1.msra.mxu0 %v295
        %338 = vmatprep.subr.mxu0 0.0
        %339 = vmatpush1.msra.mxu0 %v296
        %340 = vmatprep.subr.mxu0 0.0
        %341 = vmatpush1.msra.mxu0 %v297
        %342 = vmatprep.subr.mxu0 0.0
        %343 = vmatpush1.msra.mxu0 %v298
        %344 = vmatprep.subr.mxu0 0.0
        %345 = vmatpush1.msra.mxu0 %v299
        %346 = vmatprep.subr.mxu0 0.0
        %347 = vmatpush1.msra.mxu0 %v300
        %348 = vmatprep.subr.mxu0 0.0
        %349 = vmatpush1.msra.mxu0 %v301
        %350 = vmatprep.subr.mxu0 0.0
        %351 = vmatpush1.msra.mxu0 %v302
        %352 = vmatprep.subr.mxu0 0.0
        %353 = vmatpush1.msra.mxu0 %v303
        %354 = vmatprep.subr.mxu0 0.0
        %355 = vmatpush1.msra.mxu0 %v304
        %356 = vmatprep.subr.mxu0 0.0
        %357 = vmatpush1.msra.mxu0 %v305
        %358 = vmatprep.subr.mxu0 0.0
        %359 = vmatpush1.msra.mxu0 %v306
        %360 = vmatprep.subr.mxu0 0.0
        %361 = vmatpush1.msra.mxu0 %v307
        %362 = vmatprep.subr.mxu0 0.0
        %363 = vmatpush1.msra.mxu0 %v308
        %364 = vmatprep.subr.mxu0 0.0
        %365 = vmatpush1.msra.mxu0 %v309
        %366 = vmatprep.subr.mxu0 0.0
        %367 = vmatpush1.msra.mxu0 %v310
        %368 = vmatprep.subr.mxu0 0.0
        %369 = vmatpush1.msra.mxu0 %v311
        %370 = vmatprep.subr.mxu0 0.0
        %371 = vmatpush1.msra.mxu0 %v312
        %372 = vmatprep.subr.mxu0 0.0
        %373 = vmatpush1.msra.mxu0 %v313
        %374 = vmatprep.subr.mxu0 0.0
        %375 = vmatpush1.msra.mxu0 %v314
        %376 = vmatprep.subr.mxu0 0.0
        %377 = vmatpush1.msra.mxu0 %v315
        %378 = vmatprep.subr.mxu0 0.0
        %379 = vmatpush1.msra.mxu0 %v316
        %380 = vmatprep.subr.mxu0 0.0
        %381 = vmatpush1.msra.mxu0 %v317
        %382 = vmatprep.subr.mxu0 0.0
        %383 = vmatpush1.msra.mxu0 %v318
        %384 = vmatprep.subr.mxu0 0.0
        %385 = vmatpush1.msra.mxu0 %v319
        %386 = vmatprep.mubr.f32.mxu0 %v285
        %387 = vmatmul.mubr.f32.gmra.mrb[0].mxu0 %v284
        %v388 = vpop.f32.mrb[0].mxu0
        %v389 = vadd.f32 %v320, %v388
        %v390 = vpop.f32.mrb[0].mxu0
        %391 = vmatprep.mubr.f32.mxu0 %v287
        %392 = vmatmul.mubr.f32.gmra.mrb[0].mxu0 %v286
        %v393 = vpop.f32.mrb[0].mxu0
        %v394 = vadd.f32 %v321, %v393
        %v395 = vpop.f32.mrb[0].mxu0
        %396 = vdwg.mxu0
        %397 = vst [vmem:[%s187] sm:$0xff] %v389
        %398 = vst [vmem:[%s187 + $0x8] sm:$0xff] %v394
        %s399 = smul.u32 2, %s15
        %p400 = scmp.lt.s32.totalorder %s399, 3
        %s401 = scalar_select %p400, %s399, 3
        %s402 = smul.addr %s401, 8
        %s403 = scalar_lea.vmem %s3, %s402
        // Predicated region
        $region37: #{embeddings_forward.1} parent=31 // pred_check
          %p404 = pneg %p101
        $region38: #{embeddings_forward.1} parent=31 // pred_check_branch
          %406 = sbr.rel (%p404) target = $region40
        $region39: #{embeddings_forward.1} parent=31 // pred_region
          %s407 = smul.u32 2, %s15
        $region40: #{embeddings_forward.1} parent=31 // pred_fallthru
          _
      $region32: #{embeddings_forward.1} parent=5 // pred_fallthru
        _
      %p408 = scmp.le.s32.totalorder 2, %s10
      // Predicated region
      $region41: #{embeddings_forward.1} parent=5 // pred_check
        %p409 = pneg %p408
      $region42: #{embeddings_forward.1} parent=5 // pred_check_branch
        %411 = sbr.rel (%p409) target = $region44
      $region43: #{embeddings_forward.1} parent=5 // pred_region
        %s412 = ssub.s32 %s10, 2
        // Predicated region
        $region45: #{embeddings_forward.1} parent=43 // pred_check
          %p413 = pneg %p107
        $region46: #{embeddings_forward.1} parent=43 // pred_check_branch
          %415 = sbr.rel (%p413) target = $region48
        $region47: #{embeddings_forward.1} parent=43 // pred_region
          %s416 = smul.u32 2, %s16
          %p417 = scmp.lt.s32.totalorder %s416, 3
          %s418 = scalar_select %p417, %s416, 3
          %s419 = smul.addr %s418, 8
          %s420 = scalar_lea.vmem %s3, %s419
        $region48: #{embeddings_forward.1} parent=43 // pred_fallthru
          _
      $region44: #{embeddings_forward.1} parent=5 // pred_fallthru
        _
    $region6: #{embeddings_forward.1} parent=1 // loop_footer
      %s14 = sadd.s32 1, %s10
    $region7: #{embeddings_forward.1} parent=1 // loop_footer_branch
      %9 = sbr.rel target = $region3
    $region8: #{embeddings_forward.1} parent=1 // loop_exit
      _
    %421 = vsyncpa [#allocation3], 1
    %s422 = scalar_lea.sflag [#allocation3], 1
    %423 = vsyncpa %s422, 1

</llo_original>
